<compile_context>
chip_gen: v7x
topology: tpu7x:2x2x1
jax: 0.10.0
libtpu: 0.0.40
codegen_flags: <defaults>
</compile_context>

<pallas_src>
import functools

import jax
import jax.numpy as jnp
from jax.experimental import pallas as pl
from jax.experimental.pallas import tpu as pltpu

MARGIN = 0.5
_EPS = 1e-8
_BIG = 1e30
_LANE = 128


def _round_up(n, m):
    return ((n + m - 1) // m) * m


def _ceil_div(n, m):
    return -(-n // m)


@functools.lru_cache(maxsize=1)
def _vmem_limit_bytes():
    """Chip-aware scoped-VMEM limit: half of physical per-core VMEM, capped."""
    cap = None
    try:
        cap = getattr(pltpu.get_tpu_info(), "vmem_capacity_bytes", None)
    except Exception:
        cap = None
    if not cap:
        cap = 64 * 1024 * 1024          # conservative fallback = v7x per-TC VMEM
    return int(min(cap // 2, 96 * 1024 * 1024))


# ---------------------------------------------------------------------------
# Pass 1: per-row cosine distance for one (TB, D) tile (compute in f32).
# ---------------------------------------------------------------------------
def _distance_kernel(x_ref, y_ref, d_ref):
    x = x_ref[...].astype(jnp.float32)
    y = y_ref[...].astype(jnp.float32)
    dot = jnp.sum(x * y, axis=1, keepdims=True)             # (TB, 1)
    nx2 = jnp.sum(x * x, axis=1, keepdims=True)
    ny2 = jnp.sum(y * y, axis=1, keepdims=True)
    inv = jax.lax.rsqrt(jnp.maximum(nx2 * ny2, _EPS * _EPS))  # EUP; no sqrt/divide
    d_ref[...] = 1.0 - dot * inv
    # TODO(synk): on v7x a bf16-product + f32-accumulate variant would trim the
    # VALU/convert work further, at slightly looser numerics.


# ---------------------------------------------------------------------------
# Pass 2: streamed epilogue.  grid = (phase, chunk).  Phase 0 accumulates group
# statistics and derives the thresholds; phase 1 re-streams the chunks and
# accumulates the hard-pair selection sums using the thresholds in scratch.
# ---------------------------------------------------------------------------
def _loss_kernel(d_ref, lab_ref, out_ref,
                 cntp_ref, cntn_ref, sump_ref, sumn_ref,
                 maxp_ref, minn_ref, thrp_ref, thrn_ref, lacc_ref,
                 *, margin, rows, chunk_rows):
    phase = pl.program_id(0)
    c = pl.program_id(1)
    nc = pl.num_programs(1)

    d = d_ref[...]                                   # (CR, 128) f32
    lab = lab_ref[...]                               # (CR, 128) int32, -1 = padding
    if rows % chunk_rows != 0:                       # mask OOB rows of a partial last chunk
        rid = c * chunk_rows + jax.lax.broadcasted_iota(jnp.int32, lab.shape, 0)
        lab = jnp.where(rid < rows, lab, -1)
    pos = lab == 1
    neg = lab == 0

    @pl.when(jnp.logical_and(phase == 0, c == 0))
    def _init():
        zero = jnp.zeros((1, 1), jnp.float32)
        cntp_ref[...] = zero
        cntn_ref[...] = zero
        sump_ref[...] = zero
        sumn_ref[...] = zero
        lacc_ref[...] = zero
        maxp_ref[...] = jnp.full((1, 1), -_BIG, jnp.float32)
        minn_ref[...] = jnp.full((1, 1), _BIG, jnp.float32)

    @pl.when(phase == 0)
    def _stats():
        pos_f = pos.astype(jnp.float32)
        neg_f = neg.astype(jnp.float32)
        cntp_ref[...] += jnp.sum(pos_f)
        cntn_ref[...] += jnp.sum(neg_f)
        sump_ref[...] += jnp.sum(d * pos_f)
        sumn_ref[...] += jnp.sum(d * neg_f)
        maxp_ref[...] = jnp.maximum(maxp_ref[...], jnp.max(jnp.where(pos, d, -_BIG)))
        minn_ref[...] = jnp.minimum(minn_ref[...], jnp.min(jnp.where(neg, d, _BIG)))

    @pl.when(jnp.logical_and(phase == 0, c == nc - 1))
    def _thresholds():
        n_pos = cntp_ref[...]
        n_neg = cntn_ref[...]
        pos_mean = sump_ref[...] / jnp.maximum(n_pos, 1.0)
        neg_mean = sumn_ref[...] / jnp.maximum(n_neg, 1.0)
        # torch: use the other group's max/min when that group has >1 members,
        # otherwise fall back to the own group's mean.
        thrn_ref[...] = jnp.where(n_pos > 1.0, maxp_ref[...], neg_mean)
        thrp_ref[...] = jnp.where(n_neg > 1.0, minn_ref[...], pos_mean)

    @pl.when(phase == 1)
    def _select():
        thr_pos = thrp_ref[...]                      # (1,1) broadcasts vs (CR,128)
        thr_neg = thrn_ref[...]
        sel_pos = jnp.logical_and(pos, d > thr_pos)
        sel_neg = jnp.logical_and(neg, d < thr_neg)
        hinge = jnp.maximum(margin - d, 0.0)
        lacc_ref[...] += (jnp.sum(jnp.where(sel_pos, d * d, 0.0)) +
                          jnp.sum(jnp.where(sel_neg, hinge * hinge, 0.0)))

    @pl.when(jnp.logical_and(phase == 1, c == nc - 1))
    def _finalize():
        out_ref[...] = lacc_ref[...]


def online_contrastive_loss(emb_a, emb_b, labels, margin=MARGIN,
                            block_rows=None, epilogue_chunk_rows=256):
    """emb_a, emb_b: [B, D] float32 or (recommended: halves HBM traffic) bfloat16;
    labels: [B] int.  Returns the scalar f32 loss.  All math is f32 in-kernel."""
    B, D = emb_a.shape
    itemsize = jnp.dtype(emb_a.dtype).itemsize
    vmem_limit = _vmem_limit_bytes()
    input_budget = (vmem_limit * 3) // 4

    # Per-row VMEM bytes for pass 1: 2 inputs x 2 pipelined buffers, plus the
    # in-kernel f32 working set (upcasted x, y and one product at a time).
    per_row_bytes = 4 * D * itemsize + 4 * D * 4
    tb_cap = max(_LANE, (input_budget // per_row_bytes) // _LANE * _LANE)
    # TODO(synk): embeddings so wide that even TB=128 busts the VMEM budget
    # would additionally need a D-tiling (reduction) grid axis.

    b_pad = _round_up(B, _LANE)                 # pad only to the 128-lane quantum
    target = block_rows if block_rows is not None else 2048
    tb = max(_LANE, (min(target, tb_cap, b_pad) // _LANE) * _LANE)
    if b_pad > _LANE and _ceil_div(b_pad, tb) < 2:
        tb = _round_up(_ceil_div(b_pad, 2), _LANE)   # >=2 tiles -> both TCs on v7x
    num_tiles = _ceil_div(b_pad, tb)            # last tile may be partial (masked)

    labels = labels.reshape(B).astype(jnp.int32)
    if b_pad != B:
        pad = b_pad - B
        emb_a = jnp.pad(emb_a, ((0, pad), (0, 0)))
        emb_b = jnp.pad(emb_b, ((0, pad), (0, 0)))
        labels = jnp.pad(labels, (0, pad), constant_values=-1)  # excluded from both groups

    # ---- Pass 1: per-row cosine distances, tiled & pipelined over B ----------
    d = pl.pallas_call(
        _distance_kernel,
        out_shape=jax.ShapeDtypeStruct((b_pad, 1), jnp.float32),
        grid=(num_tiles,),
        in_specs=[
            pl.BlockSpec((tb, D), lambda i: (i, 0)),
            pl.BlockSpec((tb, D), lambda i: (i, 0)),
        ],
        out_specs=pl.BlockSpec((tb, 1), lambda i: (i, 0)),
        compiler_params=pltpu.CompilerParams(
            dimension_semantics=("parallel",),           # megacore-shardable
            vmem_limit_bytes=vmem_limit,
        ),
    )(emb_a, emb_b)

    # Wrapper-side layout plumbing: lane-dense (rows, 128) slabs for pass 2.
    rows = b_pad // _LANE
    d_lane = d.reshape(rows, _LANE)
    lab_lane = labels.reshape(rows, _LANE)
    # TODO(synk): labels could be packed to int8 to quarter the epilogue DMA.

    chunk = max(1, min(epilogue_chunk_rows, rows))
    if chunk < rows:
        chunk = max(8, (chunk // 8) * 8)        # satisfy (8,128) block constraint
    nc = _ceil_div(rows, chunk)

    # ---- Pass 2: streamed threshold + masked-selection epilogue --------------
    out = pl.pallas_call(
        functools.partial(_loss_kernel, margin=margin, rows=rows, chunk_rows=chunk),
        out_shape=jax.ShapeDtypeStruct((1, 1), jnp.float32),
        grid=(2, nc),
        in_specs=[
            pl.BlockSpec((chunk, _LANE), lambda p, c: (c, 0)),
            pl.BlockSpec((chunk, _LANE), lambda p, c: (c, 0)),
        ],
        out_specs=pl.BlockSpec((1, 1), lambda p, c: (0, 0)),
        scratch_shapes=[pltpu.VMEM((1, 1), jnp.float32)] * 9,
        compiler_params=pltpu.CompilerParams(
            dimension_semantics=("arbitrary", "arbitrary"),
            vmem_limit_bytes=vmem_limit,
        ),
    )(d_lane, lab_lane)
    return out[0, 0]


def _reference(emb_a, emb_b, labels, margin=MARGIN):
    """Plain-JAX reference mirroring the PyTorch module (for sanity check)."""
    emb_a = emb_a.astype(jnp.float32)
    emb_b = emb_b.astype(jnp.float32)
    dot = jnp.sum(emb_a * emb_b, axis=1)
    na = jnp.linalg.norm(emb_a, axis=1)
    nb = jnp.linalg.norm(emb_b, axis=1)
    d = 1.0 - dot / jnp.maximum(na * nb, _EPS)
    pos = labels == 1
    neg = labels == 0
    n_pos = jnp.sum(pos)
    n_neg = jnp.sum(neg)
    pos_max = jnp.max(jnp.where(pos, d, -_BIG))
    neg_min = jnp.min(jnp.where(neg, d, _BIG))
    pos_mean = jnp.sum(jnp.where(pos, d, 0.0)) / jnp.maximum(n_pos, 1)
    neg_mean = jnp.sum(jnp.where(neg, d, 0.0)) / jnp.maximum(n_neg, 1)
    thr_neg = jnp.where(n_pos > 1, pos_max, neg_mean)
    thr_pos = jnp.where(n_neg > 1, neg_min, pos_mean)
    pl_ = jnp.sum(jnp.where(pos & (d > thr_pos), d * d, 0.0))
    nl_ = jnp.sum(jnp.where(neg & (d < thr_neg),
                            jnp.maximum(margin - d, 0.0) ** 2, 0.0))
    return pl_ + nl_


if __name__ == "__main__":
    key = jax.random.PRNGKey(0)
    k1, k2, k3, k4, k5 = jax.random.split(key, 5)

    # Small shape consistent with the module (batch=8, hidden=32).
    B, D = 8, 32
    emb_a = jax.random.normal(k1, (B, D), dtype=jnp.float32)
    emb_b = jax.random.normal(k2, (B, D), dtype=jnp.float32)
    labels = jnp.array([1, 0, 1, 0, 1, 1, 0, 0], dtype=jnp.int32)

    # float32 path
    loss = online_contrastive_loss(emb_a, emb_b, labels)
    jax.block_until_ready(loss)
    ref = _reference(emb_a, emb_b, labels)
    assert jnp.allclose(loss, ref, atol=1e-4, rtol=1e-4), (loss, ref)

    # bfloat16 embeddings in HBM (recommended: half the pass-1 DMA bytes).
    a16 = emb_a.astype(jnp.bfloat16)
    b16 = emb_b.astype(jnp.bfloat16)
    loss16 = online_contrastive_loss(a16, b16, labels)
    jax.block_until_ready(loss16)
    ref16 = _reference(a16, b16, labels)
    assert jnp.allclose(loss16, ref16, atol=1e-3, rtol=1e-3), (loss16, ref16)

    # Coverage: B not a multiple of the row tile (partial pass-1 tile, padding
    # only to 128) and a multi-chunk / partial-last-chunk pass-2 epilogue.
    B2, D2 = 1100, 32
    a2 = jax.random.normal(k3, (B2, D2), dtype=jnp.float32)
    b2 = jax.random.normal(k4, (B2, D2), dtype=jnp.float32)
    lab2 = (jax.random.uniform(k5, (B2,)) > 0.5).astype(jnp.int32)
    loss2 = online_contrastive_loss(a2, b2, lab2, block_rows=512, epilogue_chunk_rows=8)
    jax.block_until_ready(loss2)
    ref2 = _reference(a2, b2, lab2)
    assert jnp.allclose(loss2, ref2, atol=1e-2, rtol=1e-3), (loss2, ref2)

    print("KERNEL_OK")
</pallas_src>

<mosaic_0001>
module attributes {stable_mosaic.version = 11 : i64} {
  func.func @_distance_kernel(%arg0: i32, %arg1: memref<128x32xf32, #tpu.memory_space<vmem>>, %arg2: memref<128x32xf32, #tpu.memory_space<vmem>>, %arg3: memref<128x1xf32, #tpu.memory_space<vmem>>) attributes {dimension_semantics = [#tpu.dimension_semantics<parallel>], iteration_bounds = array<i64: 1>, scalar_prefetch = 0 : i64, scratch_operands = 0 : i64, tpu.core_type = #tpu.core_type<tc>, window_params = [{transform_indices = @transform_0, window_bounds = array<i64: 128, 32>}, {transform_indices = @transform_1, window_bounds = array<i64: 128, 32>}, {transform_indices = @transform_2, window_bounds = array<i64: 128, 1>}]} {
    %c0 = arith.constant 0 : index
    %c0_0 = arith.constant 0 : index
    %0 = vector.load %arg1[%c0, %c0_0] : memref<128x32xf32, #tpu.memory_space<vmem>>, vector<128x32xf32>
    %c0_1 = arith.constant 0 : index
    %c0_2 = arith.constant 0 : index
    %1 = vector.load %arg2[%c0_1, %c0_2] : memref<128x32xf32, #tpu.memory_space<vmem>>, vector<128x32xf32>
    %2 = arith.mulf %0, %1 : vector<128x32xf32>
    %cst = arith.constant dense<0.000000e+00> : vector<128xf32>
    %3 = vector.multi_reduction <add>, %2, %cst [1] : vector<128x32xf32> to vector<128xf32>
    %4 = vector.shape_cast %3 : vector<128xf32> to vector<128x1xf32>
    %5 = arith.mulf %0, %0 : vector<128x32xf32>
    %cst_3 = arith.constant dense<0.000000e+00> : vector<128xf32>
    %6 = vector.multi_reduction <add>, %5, %cst_3 [1] : vector<128x32xf32> to vector<128xf32>
    %7 = vector.shape_cast %6 : vector<128xf32> to vector<128x1xf32>
    %8 = arith.mulf %1, %1 : vector<128x32xf32>
    %cst_4 = arith.constant dense<0.000000e+00> : vector<128xf32>
    %9 = vector.multi_reduction <add>, %8, %cst_4 [1] : vector<128x32xf32> to vector<128xf32>
    %10 = vector.shape_cast %9 : vector<128xf32> to vector<128x1xf32>
    %11 = arith.mulf %7, %10 : vector<128x1xf32>
    %cst_5 = arith.constant 1.000000e-16 : f32
    %12 = vector.broadcast %cst_5 : f32 to vector<128x1xf32>
    %13 = arith.maximumf %11, %12 : vector<128x1xf32>
    %14 = math.rsqrt %13 : vector<128x1xf32>
    %15 = arith.mulf %4, %14 : vector<128x1xf32>
    %cst_6 = arith.constant 1.000000e+00 : f32
    %16 = vector.broadcast %cst_6 : f32 to vector<128x1xf32>
    %17 = arith.subf %16, %15 : vector<128x1xf32>
    %c0_7 = arith.constant 0 : index
    %c0_8 = arith.constant 0 : index
    %18 = vector.load %arg3[%c0_7, %c0_8] : memref<128x1xf32, #tpu.memory_space<vmem>>, vector<128x1xf32>
    tpu.vector_store %arg3[%c0_7, %c0_8], %17 {strides = array<i32>} : memref<128x1xf32, #tpu.memory_space<vmem>>, vector<128x1xf32>,
    return
  }
  func.func @transform_0(%arg0: i32) -> (i32, i32) {
    %c0_i32 = arith.constant 0 : i32
    %c0_i32_0 = arith.constant 0 : i32
    return %arg0, %c0_i32 : i32, i32
  }
  func.func @transform_1(%arg0: i32) -> (i32, i32) {
    %c0_i32 = arith.constant 0 : i32
    %c0_i32_0 = arith.constant 0 : i32
    return %arg0, %c0_i32 : i32, i32
  }
  func.func @transform_2(%arg0: i32) -> (i32, i32) {
    %c0_i32 = arith.constant 0 : i32
    %c0_i32_0 = arith.constant 0 : i32
    return %arg0, %c0_i32 : i32, i32
  }
}

</mosaic_0001>

<llo_original>
// kernel: tpu_custom_call.1
$region0: #{tpu_custom_call.1}
  #allocation0 [shape = 'u32[]', space=smem, size = 0x4, offset = 0x4, fixed_abs, tag = 'smem constant byte address 0x4 - core index']
  #allocation1 [shape = 'u32[144,128]{1,0:T(1,128)}', space=vmem, size = 0x12000, scoped, tag = 'internal scratch']
  %s0 = inlined_call_operand.vmem [shape: f32[128,32], index: 0, kind: input, shape index: {}]
  %s1 = inlined_call_operand.vmem [shape: f32[128,32], index: 1, kind: input, shape index: {}]
  %s2 = inlined_call_operand.vmem [shape: f32[128,1], index: 2, kind: output, shape index: {}]
  %s3 = sld [smem:[#allocation0]]
  $region18: #{tpu_custom_call.1} parent=0
    _
  %s5 = ssub.s32 1, %s3
  %s6 = scalar_select 0, %s5, %s3
  // Predicated region
  $region2: #{tpu_custom_call.1} parent=0 // pred_check
    _
  $region3: #{tpu_custom_call.1} parent=0 // pred_check_branch
    %8 = sbr.rel (0) target = $region5
  $region4: #{tpu_custom_call.1} parent=0 // pred_region
    _
  $region5: #{tpu_custom_call.1} parent=0 // pred_fallthru
    _
  // Predicated region
  $region6: #{tpu_custom_call.1} parent=0 // pred_check
    _
  $region7: #{tpu_custom_call.1} parent=0 // pred_check_branch
    %10 = sbr.rel (0) target = $region9
  $region8: #{tpu_custom_call.1} parent=0 // pred_region
    _
  $region9: #{tpu_custom_call.1} parent=0 // pred_fallthru
    _
  %v11 = vld [vmem:[%s0] sm:$0xff]
  %v12 = vld [vmem:[%s0 + $0x8] sm:$0xff]
  %v13 = vld [vmem:[%s0 + $0x10] sm:$0xff]
  %v14 = vld [vmem:[%s0 + $0x18] sm:$0xff]
  %v15 = vld [vmem:[%s0 + $0x20] sm:$0xff]
  %v16 = vld [vmem:[%s0 + $0x28] sm:$0xff]
  %v17 = vld [vmem:[%s0 + $0x30] sm:$0xff]
  %v18 = vld [vmem:[%s0 + $0x38] sm:$0xff]
  %v19 = vld [vmem:[%s0 + $0x40] sm:$0xff]
  %v20 = vld [vmem:[%s0 + $0x48] sm:$0xff]
  %v21 = vld [vmem:[%s0 + $0x50] sm:$0xff]
  %v22 = vld [vmem:[%s0 + $0x58] sm:$0xff]
  %v23 = vld [vmem:[%s0 + $0x60] sm:$0xff]
  %v24 = vld [vmem:[%s0 + $0x68] sm:$0xff]
  %v25 = vld [vmem:[%s0 + $0x70] sm:$0xff]
  %v26 = vld [vmem:[%s0 + $0x78] sm:$0xff]
  %v27 = vld [vmem:[%s1] sm:$0xff]
  %v28 = vld [vmem:[%s1 + $0x8] sm:$0xff]
  %v29 = vld [vmem:[%s1 + $0x10] sm:$0xff]
  %v30 = vld [vmem:[%s1 + $0x18] sm:$0xff]
  %v31 = vld [vmem:[%s1 + $0x20] sm:$0xff]
  %v32 = vld [vmem:[%s1 + $0x28] sm:$0xff]
  %v33 = vld [vmem:[%s1 + $0x30] sm:$0xff]
  %v34 = vld [vmem:[%s1 + $0x38] sm:$0xff]
  %v35 = vld [vmem:[%s1 + $0x40] sm:$0xff]
  %v36 = vld [vmem:[%s1 + $0x48] sm:$0xff]
  %v37 = vld [vmem:[%s1 + $0x50] sm:$0xff]
  %v38 = vld [vmem:[%s1 + $0x58] sm:$0xff]
  %v39 = vld [vmem:[%s1 + $0x60] sm:$0xff]
  %v40 = vld [vmem:[%s1 + $0x68] sm:$0xff]
  %v41 = vld [vmem:[%s1 + $0x70] sm:$0xff]
  %v42 = vld [vmem:[%s1 + $0x78] sm:$0xff]
  %v43 = vmul.f32 %v11, %v27
  %v44 = vmul.f32 %v12, %v28
  %v45 = vmul.f32 %v13, %v29
  %v46 = vmul.f32 %v14, %v30
  %v47 = vmul.f32 %v15, %v31
  %v48 = vmul.f32 %v16, %v32
  %v49 = vmul.f32 %v17, %v33
  %v50 = vmul.f32 %v18, %v34
  %v51 = vmul.f32 %v19, %v35
  %v52 = vmul.f32 %v20, %v36
  %v53 = vmul.f32 %v21, %v37
  %v54 = vmul.f32 %v22, %v38
  %v55 = vmul.f32 %v23, %v39
  %v56 = vmul.f32 %v24, %v40
  %v57 = vmul.f32 %v25, %v41
  %v58 = vmul.f32 %v26, %v42
  %vm59 = vcmask 261120
  %v60 = vsel %vm59, %v43, 0.0
  %61 = vadd.xlane.f32.xlu0 %v60
  %v62 = vpop.xlane.xlu0 %61
  %v63 = vsel %vm59, %v44, 0.0
  %64 = vadd.xlane.f32.xlu0 %v63
  %v65 = vpop.xlane.xlu0 %64
  %v66 = vsel %vm59, %v45, 0.0
  %67 = vadd.xlane.f32.xlu0 %v66
  %v68 = vpop.xlane.xlu0 %67
  %v69 = vsel %vm59, %v46, 0.0
  %70 = vadd.xlane.f32.xlu0 %v69
  %v71 = vpop.xlane.xlu0 %70
  %v72 = vsel %vm59, %v47, 0.0
  %73 = vadd.xlane.f32.xlu0 %v72
  %v74 = vpop.xlane.xlu0 %73
  %v75 = vsel %vm59, %v48, 0.0
  %76 = vadd.xlane.f32.xlu0 %v75
  %v77 = vpop.xlane.xlu0 %76
  %v78 = vsel %vm59, %v49, 0.0
  %79 = vadd.xlane.f32.xlu0 %v78
  %v80 = vpop.xlane.xlu0 %79
  %v81 = vsel %vm59, %v50, 0.0
  %82 = vadd.xlane.f32.xlu0 %v81
  %v83 = vpop.xlane.xlu0 %82
  %v84 = vsel %vm59, %v51, 0.0
  %85 = vadd.xlane.f32.xlu0 %v84
  %v86 = vpop.xlane.xlu0 %85
  %v87 = vsel %vm59, %v52, 0.0
  %88 = vadd.xlane.f32.xlu0 %v87
  %v89 = vpop.xlane.xlu0 %88
  %v90 = vsel %vm59, %v53, 0.0
  %91 = vadd.xlane.f32.xlu0 %v90
  %v92 = vpop.xlane.xlu0 %91
  %v93 = vsel %vm59, %v54, 0.0
  %94 = vadd.xlane.f32.xlu0 %v93
  %v95 = vpop.xlane.xlu0 %94
  %v96 = vsel %vm59, %v55, 0.0
  %97 = vadd.xlane.f32.xlu0 %v96
  %v98 = vpop.xlane.xlu0 %97
  %v99 = vsel %vm59, %v56, 0.0
  %100 = vadd.xlane.f32.xlu0 %v99
  %v101 = vpop.xlane.xlu0 %100
  %v102 = vsel %vm59, %v57, 0.0
  %103 = vadd.xlane.f32.xlu0 %v102
  %v104 = vpop.xlane.xlu0 %103
  %v105 = vsel %vm59, %v58, 0.0
  %106 = vadd.xlane.f32.xlu0 %v105
  %v107 = vpop.xlane.xlu0 %106
  %v108 = vmul.f32 %v11, %v11
  %v109 = vmul.f32 %v12, %v12
  %v110 = vmul.f32 %v13, %v13
  %v111 = vmul.f32 %v14, %v14
  %v112 = vmul.f32 %v15, %v15
  %v113 = vmul.f32 %v16, %v16
  %v114 = vmul.f32 %v17, %v17
  %v115 = vmul.f32 %v18, %v18
  %v116 = vmul.f32 %v19, %v19
  %v117 = vmul.f32 %v20, %v20
  %v118 = vmul.f32 %v21, %v21
  %v119 = vmul.f32 %v22, %v22
  %v120 = vmul.f32 %v23, %v23
  %v121 = vmul.f32 %v24, %v24
  %v122 = vmul.f32 %v25, %v25
  %v123 = vmul.f32 %v26, %v26
  %v124 = vsel %vm59, %v108, 0.0
  %125 = vadd.xlane.f32.xlu0 %v124
  %v126 = vpop.xlane.xlu0 %125
  %v127 = vsel %vm59, %v109, 0.0
  %128 = vadd.xlane.f32.xlu0 %v127
  %v129 = vpop.xlane.xlu0 %128
  %v130 = vsel %vm59, %v110, 0.0
  %131 = vadd.xlane.f32.xlu0 %v130
  %v132 = vpop.xlane.xlu0 %131
  %v133 = vsel %vm59, %v111, 0.0
  %134 = vadd.xlane.f32.xlu0 %v133
  %v135 = vpop.xlane.xlu0 %134
  %v136 = vsel %vm59, %v112, 0.0
  %137 = vadd.xlane.f32.xlu0 %v136
  %v138 = vpop.xlane.xlu0 %137
  %v139 = vsel %vm59, %v113, 0.0
  %140 = vadd.xlane.f32.xlu0 %v139
  %v141 = vpop.xlane.xlu0 %140
  %v142 = vsel %vm59, %v114, 0.0
  %143 = vadd.xlane.f32.xlu0 %v142
  %v144 = vpop.xlane.xlu0 %143
  %v145 = vsel %vm59, %v115, 0.0
  %146 = vadd.xlane.f32.xlu0 %v145
  %v147 = vpop.xlane.xlu0 %146
  %v148 = vsel %vm59, %v116, 0.0
  %149 = vadd.xlane.f32.xlu0 %v148
  %v150 = vpop.xlane.xlu0 %149
  %v151 = vsel %vm59, %v117, 0.0
  %152 = vadd.xlane.f32.xlu0 %v151
  %v153 = vpop.xlane.xlu0 %152
  %v154 = vsel %vm59, %v118, 0.0
  %155 = vadd.xlane.f32.xlu0 %v154
  %v156 = vpop.xlane.xlu0 %155
  %v157 = vsel %vm59, %v119, 0.0
  %158 = vadd.xlane.f32.xlu0 %v157
  %v159 = vpop.xlane.xlu0 %158
  %v160 = vsel %vm59, %v120, 0.0
  %161 = vadd.xlane.f32.xlu0 %v160
  %v162 = vpop.xlane.xlu0 %161
  %v163 = vsel %vm59, %v121, 0.0
  %164 = vadd.xlane.f32.xlu0 %v163
  %v165 = vpop.xlane.xlu0 %164
  %v166 = vsel %vm59, %v122, 0.0
  %167 = vadd.xlane.f32.xlu0 %v166
  %v168 = vpop.xlane.xlu0 %167
  %v169 = vsel %vm59, %v123, 0.0
  %170 = vadd.xlane.f32.xlu0 %v169
  %v171 = vpop.xlane.xlu0 %170
  %v172 = vmul.f32 %v27, %v27
  %v173 = vmul.f32 %v28, %v28
  %v174 = vmul.f32 %v29, %v29
  %v175 = vmul.f32 %v30, %v30
  %v176 = vmul.f32 %v31, %v31
  %v177 = vmul.f32 %v32, %v32
  %v178 = vmul.f32 %v33, %v33
  %v179 = vmul.f32 %v34, %v34
  %v180 = vmul.f32 %v35, %v35
  %v181 = vmul.f32 %v36, %v36
  %v182 = vmul.f32 %v37, %v37
  %v183 = vmul.f32 %v38, %v38
  %v184 = vmul.f32 %v39, %v39
  %v185 = vmul.f32 %v40, %v40
  %v186 = vmul.f32 %v41, %v41
  %v187 = vmul.f32 %v42, %v42
  %v188 = vsel %vm59, %v172, 0.0
  %189 = vadd.xlane.f32.xlu0 %v188
  %v190 = vpop.xlane.xlu0 %189
  %v191 = vsel %vm59, %v173, 0.0
  %192 = vadd.xlane.f32.xlu0 %v191
  %v193 = vpop.xlane.xlu0 %192
  %v194 = vsel %vm59, %v174, 0.0
  %195 = vadd.xlane.f32.xlu0 %v194
  %v196 = vpop.xlane.xlu0 %195
  %v197 = vsel %vm59, %v175, 0.0
  %198 = vadd.xlane.f32.xlu0 %v197
  %v199 = vpop.xlane.xlu0 %198
  %v200 = vsel %vm59, %v176, 0.0
  %201 = vadd.xlane.f32.xlu0 %v200
  %v202 = vpop.xlane.xlu0 %201
  %v203 = vsel %vm59, %v177, 0.0
  %204 = vadd.xlane.f32.xlu0 %v203
  %v205 = vpop.xlane.xlu0 %204
  %v206 = vsel %vm59, %v178, 0.0
  %207 = vadd.xlane.f32.xlu0 %v206
  %v208 = vpop.xlane.xlu0 %207
  %v209 = vsel %vm59, %v179, 0.0
  %210 = vadd.xlane.f32.xlu0 %v209
  %v211 = vpop.xlane.xlu0 %210
  %v212 = vsel %vm59, %v180, 0.0
  %213 = vadd.xlane.f32.xlu0 %v212
  %v214 = vpop.xlane.xlu0 %213
  %v215 = vsel %vm59, %v181, 0.0
  %216 = vadd.xlane.f32.xlu0 %v215
  %v217 = vpop.xlane.xlu0 %216
  %v218 = vsel %vm59, %v182, 0.0
  %219 = vadd.xlane.f32.xlu0 %v218
  %v220 = vpop.xlane.xlu0 %219
  %v221 = vsel %vm59, %v183, 0.0
  %222 = vadd.xlane.f32.xlu0 %v221
  %v223 = vpop.xlane.xlu0 %222
  %v224 = vsel %vm59, %v184, 0.0
  %225 = vadd.xlane.f32.xlu0 %v224
  %v226 = vpop.xlane.xlu0 %225
  %v227 = vsel %vm59, %v185, 0.0
  %228 = vadd.xlane.f32.xlu0 %v227
  %v229 = vpop.xlane.xlu0 %228
  %v230 = vsel %vm59, %v186, 0.0
  %231 = vadd.xlane.f32.xlu0 %v230
  %v232 = vpop.xlane.xlu0 %231
  %v233 = vsel %vm59, %v187, 0.0
  %234 = vadd.xlane.f32.xlu0 %v233
  %v235 = vpop.xlane.xlu0 %234
  %v236 = vmul.f32 %v126, %v190
  %v237 = vmul.f32 %v129, %v193
  %v238 = vmul.f32 %v132, %v196
  %v239 = vmul.f32 %v135, %v199
  %v240 = vmul.f32 %v138, %v202
  %v241 = vmul.f32 %v141, %v205
  %v242 = vmul.f32 %v144, %v208
  %v243 = vmul.f32 %v147, %v211
  %v244 = vmul.f32 %v150, %v214
  %v245 = vmul.f32 %v153, %v217
  %v246 = vmul.f32 %v156, %v220
  %v247 = vmul.f32 %v159, %v223
  %v248 = vmul.f32 %v162, %v226
  %v249 = vmul.f32 %v165, %v229
  %v250 = vmul.f32 %v168, %v232
  %v251 = vmul.f32 %v171, %v235
  %v252 = vmax.f32 %v236, 1e-16
  %v253 = vmax.f32 %v237, 1e-16
  %v254 = vmax.f32 %v238, 1e-16
  %v255 = vmax.f32 %v239, 1e-16
  %v256 = vmax.f32 %v240, 1e-16
  %v257 = vmax.f32 %v241, 1e-16
  %v258 = vmax.f32 %v242, 1e-16
  %v259 = vmax.f32 %v243, 1e-16
  %v260 = vmax.f32 %v244, 1e-16
  %v261 = vmax.f32 %v245, 1e-16
  %v262 = vmax.f32 %v246, 1e-16
  %v263 = vmax.f32 %v247, 1e-16
  %v264 = vmax.f32 %v248, 1e-16
  %v265 = vmax.f32 %v249, 1e-16
  %v266 = vmax.f32 %v250, 1e-16
  %v267 = vmax.f32 %v251, 1e-16
  %v268 = vrsqrt.pop %v252
  %v269 = vrsqrt.pop %v253
  %v270 = vrsqrt.pop %v254
  %v271 = vrsqrt.pop %v255
  %v272 = vrsqrt.pop %v256
  %v273 = vrsqrt.pop %v257
  %v274 = vrsqrt.pop %v258
  %v275 = vrsqrt.pop %v259
  %v276 = vrsqrt.pop %v260
  %v277 = vrsqrt.pop %v261
  %v278 = vrsqrt.pop %v262
  %v279 = vrsqrt.pop %v263
  %v280 = vrsqrt.pop %v264
  %v281 = vrsqrt.pop %v265
  %v282 = vrsqrt.pop %v266
  %v283 = vrsqrt.pop %v267
  %v284 = vmul.f32 %v62, %v268
  %v285 = vmul.f32 %v65, %v269
  %v286 = vmul.f32 %v68, %v270
  %v287 = vmul.f32 %v71, %v271
  %v288 = vmul.f32 %v74, %v272
  %v289 = vmul.f32 %v77, %v273
  %v290 = vmul.f32 %v80, %v274
  %v291 = vmul.f32 %v83, %v275
  %v292 = vmul.f32 %v86, %v276
  %v293 = vmul.f32 %v89, %v277
  %v294 = vmul.f32 %v92, %v278
  %v295 = vmul.f32 %v95, %v279
  %v296 = vmul.f32 %v98, %v280
  %v297 = vmul.f32 %v101, %v281
  %v298 = vmul.f32 %v104, %v282
  %v299 = vmul.f32 %v107, %v283
  %v300 = vsub.f32 1.0, %v284
  %v301 = vsub.f32 1.0, %v285
  %v302 = vsub.f32 1.0, %v286
  %v303 = vsub.f32 1.0, %v287
  %v304 = vsub.f32 1.0, %v288
  %v305 = vsub.f32 1.0, %v289
  %v306 = vsub.f32 1.0, %v290
  %v307 = vsub.f32 1.0, %v291
  %v308 = vsub.f32 1.0, %v292
  %v309 = vsub.f32 1.0, %v293
  %v310 = vsub.f32 1.0, %v294
  %v311 = vsub.f32 1.0, %v295
  %v312 = vsub.f32 1.0, %v296
  %v313 = vsub.f32 1.0, %v297
  %v314 = vsub.f32 1.0, %v298
  %v315 = vsub.f32 1.0, %v299
  %vm316 = vcmask 7168
  %317 = vst.msk [vmem:[%s2] sm:$0xff] %vm316, %v300
  %318 = vst.msk [vmem:[%s2 + $0x8] sm:$0xff] %vm316, %v301
  %319 = vst.msk [vmem:[%s2 + $0x10] sm:$0xff] %vm316, %v302
  %320 = vst.msk [vmem:[%s2 + $0x18] sm:$0xff] %vm316, %v303
  %321 = vst.msk [vmem:[%s2 + $0x20] sm:$0xff] %vm316, %v304
  %322 = vst.msk [vmem:[%s2 + $0x28] sm:$0xff] %vm316, %v305
  %323 = vst.msk [vmem:[%s2 + $0x30] sm:$0xff] %vm316, %v306
  %324 = vst.msk [vmem:[%s2 + $0x38] sm:$0xff] %vm316, %v307
  %325 = vst.msk [vmem:[%s2 + $0x40] sm:$0xff] %vm316, %v308
  %326 = vst.msk [vmem:[%s2 + $0x48] sm:$0xff] %vm316, %v309
  %327 = vst.msk [vmem:[%s2 + $0x50] sm:$0xff] %vm316, %v310
  %328 = vst.msk [vmem:[%s2 + $0x58] sm:$0xff] %vm316, %v311
  %329 = vst.msk [vmem:[%s2 + $0x60] sm:$0xff] %vm316, %v312
  %330 = vst.msk [vmem:[%s2 + $0x68] sm:$0xff] %vm316, %v313
  %331 = vst.msk [vmem:[%s2 + $0x70] sm:$0xff] %vm316, %v314
  %332 = vst.msk [vmem:[%s2 + $0x78] sm:$0xff] %vm316, %v315
  // Predicated region
  $region10: #{tpu_custom_call.1} parent=0 // pred_check
    _
  $region11: #{tpu_custom_call.1} parent=0 // pred_check_branch
    %334 = sbr.rel (0) target = $region13
  $region12: #{tpu_custom_call.1} parent=0 // pred_region
    _
  $region13: #{tpu_custom_call.1} parent=0 // pred_fallthru
    _
  // Predicated region
  $region14: #{tpu_custom_call.1} parent=0 // pred_check
    _
  $region15: #{tpu_custom_call.1} parent=0 // pred_check_branch
    %336 = sbr.rel (0) target = $region17
  $region16: #{tpu_custom_call.1} parent=0 // pred_region
    _
  $region17: #{tpu_custom_call.1} parent=0 // pred_fallthru
    _

</llo_original>
